<compile_context>
chip_gen: v7x
topology: tpu7x:2x2x1
jax: 0.10.0
libtpu: 0.0.40
codegen_flags: <defaults>
</compile_context>

<pallas_src>
import jax
import jax.numpy as jnp
from jax import lax
from jax.experimental import pallas as pl
from jax.experimental.pallas import tpu as pltpu

LN_EPS = 1e-5


def _layernorm(h):
    # elementwise_affine=False -> normalize only.
    m = jnp.mean(h, axis=-1, keepdims=True)
    v = jnp.mean((h - m) * (h - m), axis=-1, keepdims=True)
    return (h - m) * lax.rsqrt(v + LN_EPS)


def _make_kernel(scale, dim_act):
    def kernel(x_ref, w1_ref, b1_ref, w2_ref, b2_ref,
               zT_ref, z2_ref, wh_ref, out_ref):
        # --- arch: Linear(dim_obs, 64) -> LayerNorm(64) -> SiLU ---
        h = jnp.dot(x_ref[...], w1_ref[...],
                    preferred_element_type=jnp.float32) + b1_ref[...]
        h = _layernorm(h)
        # SiLU = x * sigmoid(x); approx reciprocal rides the EUP slot.
        h = h * pl.reciprocal(1.0 + jnp.exp(-h), approx=True)

        # --- arch: Linear(64, 16) -> LayerNorm(16) ---
        h = jnp.dot(h.astype(jnp.bfloat16), w2_ref[...],
                    preferred_element_type=jnp.float32) + b2_ref[...]
        h = _layernorm(h)                                    # [TB, 16] f32

        # --- head: RBF kernel against n_inducing inducing points ---
        cross = jnp.dot(h.astype(jnp.bfloat16), zT_ref[...],
                        preferred_element_type=jnp.float32)  # [TB, n_ind]
        x2 = jnp.sum(h * h, axis=-1, keepdims=True)          # [TB, 1]
        d2 = jnp.maximum(x2 + z2_ref[...] - 2.0 * cross, 0.0)
        k = jnp.exp(-0.5 * d2)                               # unit lengthscale

        # --- head: fused GP readout (mu | log_std) + squashing ---
        out = jnp.dot(k.astype(jnp.bfloat16), wh_ref[...],
                      preferred_element_type=jnp.float32)    # [TB, 2*dim_act]
        lane = lax.broadcasted_iota(jnp.int32, out.shape, 1)
        squashed_mu = scale * jnp.tanh(out)
        std = jnp.exp(jnp.clip(out, -20.0, 2.0))
        out_ref[...] = jnp.where(lane < dim_act, squashed_mu, std)

    return kernel


def actor_net_gp(x, params):
    """x: [B, dim_obs] float32.  Returns (squashed_mean, std), each [B, dim_act]."""
    B, dim_obs = x.shape
    n_ind, two_a = params["whead"].shape
    dim_act = two_a // 2
    scale = float(params["scale"])

    # Batch tiling: TB rows per grid step, padded so B_pad % TB == 0.
    B8 = pl.cdiv(B, 8) * 8
    TB = min(512, B8)
    B_pad = pl.cdiv(B8, TB) * TB
    grid = (B_pad // TB,)

    # bf16 on the MXU path (inputs + matmul weights); biases / z2 stay f32.
    xb = x.astype(jnp.bfloat16)
    if B_pad != B:
        xb = jnp.pad(xb, ((0, B_pad - B), (0, 0)))
    w1 = params["w1"].astype(jnp.bfloat16)
    w2 = params["w2"].astype(jnp.bfloat16)
    zT = params["zT"].astype(jnp.bfloat16)
    wh = params["whead"].astype(jnp.bfloat16)
    b1 = params["b1"]
    b2 = params["b2"]
    # Constant ||z||^2 hoisted out of the kernel.
    z2 = jnp.sum(params["zT"] * params["zT"], axis=0, keepdims=True)  # [1, n_ind]

    in_specs = [
        pl.BlockSpec((TB, dim_obs), lambda i: (i, 0)),        # x       (tiled)
        pl.BlockSpec((dim_obs, 64), lambda i: (0, 0)),        # w1      (resident)
        pl.BlockSpec((1, 64), lambda i: (0, 0)),              # b1
        pl.BlockSpec((64, 16), lambda i: (0, 0)),             # w2
        pl.BlockSpec((1, 16), lambda i: (0, 0)),              # b2
        pl.BlockSpec((16, n_ind), lambda i: (0, 0)),          # z^T
        pl.BlockSpec((1, n_ind), lambda i: (0, 0)),           # ||z||^2
        pl.BlockSpec((n_ind, two_a), lambda i: (0, 0)),       # [wmu | wls]
    ]
    out_spec = pl.BlockSpec((TB, two_a), lambda i: (i, 0))

    out = pl.pallas_call(
        _make_kernel(scale, dim_act),
        out_shape=jax.ShapeDtypeStruct((B_pad, two_a), jnp.float32),
        grid=grid,
        in_specs=in_specs,
        out_specs=out_spec,
        compiler_params=pltpu.CompilerParams(
            dimension_semantics=("parallel",)),
    )(xb, w1, b1, w2, b2, zT, z2, wh)

    out = out[:B]
    return out[:, :dim_act], out[:, dim_act:]


def actor_net_gp_reference(x, params):
    """Pure-JAX f32 reference for correctness checks."""
    h = x @ params["w1"] + params["b1"]
    h = _layernorm(h)
    h = h * jax.nn.sigmoid(h)
    h = h @ params["w2"] + params["b2"]
    h = _layernorm(h)
    zT = params["zT"]
    d2 = jnp.maximum(
        jnp.sum(h * h, -1, keepdims=True)
        + jnp.sum(zT * zT, 0, keepdims=True)
        - 2.0 * (h @ zT), 0.0)
    k = jnp.exp(-0.5 * d2)
    out = k @ params["whead"]
    a = params["whead"].shape[1] // 2
    mu = params["scale"] * jnp.tanh(out[:, :a])
    std = jnp.exp(jnp.clip(out[:, a:], -20.0, 2.0))
    return mu, std


def init_params(key, dim_obs, dim_act, n_inducing=128, scale=3.0):
    ks = jax.random.split(key, 7)
    # Linear weights stored transposed ([in, out]) relative to torch's [out, in].
    w1 = jax.random.normal(ks[0], (dim_obs, 64), jnp.float32) * (1.0 / jnp.sqrt(dim_obs))
    b1 = jax.random.normal(ks[1], (1, 64), jnp.float32) * 0.01
    w2 = jax.random.normal(ks[2], (64, 16), jnp.float32) * (1.0 / jnp.sqrt(64.0))
    b2 = jax.random.normal(ks[3], (1, 16), jnp.float32) * 0.01
    zT = jax.random.normal(ks[4], (16, n_inducing), jnp.float32)        # inducing points^T
    wmu = jax.random.normal(ks[5], (n_inducing, dim_act), jnp.float32) * 0.1
    wls = jax.random.normal(ks[6], (n_inducing, dim_act), jnp.float32) * 0.1
    whead = jnp.concatenate([wmu, wls], axis=1)                          # fused readout
    return {"w1": w1, "b1": b1, "w2": w2, "b2": b2,
            "zT": zT, "whead": whead, "scale": float(scale)}


if __name__ == "__main__":
    key = jax.random.PRNGKey(0)
    kx, kp = jax.random.split(key)

    B, dim_obs, dim_act = 8, 32, 4
    x = jax.random.normal(kx, (B, dim_obs), jnp.float32)
    params = init_params(kp, dim_obs, dim_act, n_inducing=128, scale=3.0)

    mu, std = jax.block_until_ready(actor_net_gp(x, params))
    assert mu.shape == (B, dim_act) and std.shape == (B, dim_act)
    assert bool(jnp.all(jnp.isfinite(mu))) and bool(jnp.all(std > 0))

    # Check against the f32 pure-JAX reference (bf16 MXU path -> loose tol).
    mu_ref, std_ref = actor_net_gp_reference(x, params)
    assert bool(jnp.max(jnp.abs(mu - mu_ref)) < 0.25), "mu mismatch vs reference"
    assert bool(jnp.max(jnp.abs(std - std_ref) / std_ref) < 0.25), "std mismatch vs reference"

    print("KERNEL_OK")
</pallas_src>

<mosaic_0001>
module attributes {stable_mosaic.version = 11 : i64} {
  func.func @kernel(%arg0: i32, %arg1: memref<8x32xbf16, #tpu.memory_space<vmem>>, %arg2: memref<32x64xbf16, #tpu.memory_space<vmem>>, %arg3: memref<1x64xf32, #tpu.memory_space<vmem>>, %arg4: memref<64x16xbf16, #tpu.memory_space<vmem>>, %arg5: memref<1x16xf32, #tpu.memory_space<vmem>>, %arg6: memref<16x128xbf16, #tpu.memory_space<vmem>>, %arg7: memref<1x128xf32, #tpu.memory_space<vmem>>, %arg8: memref<128x8xbf16, #tpu.memory_space<vmem>>, %arg9: memref<8x8xf32, #tpu.memory_space<vmem>>) attributes {dimension_semantics = [#tpu.dimension_semantics<parallel>], iteration_bounds = array<i64: 1>, scalar_prefetch = 0 : i64, scratch_operands = 0 : i64, tpu.core_type = #tpu.core_type<tc>, window_params = [{transform_indices = @transform_0, window_bounds = array<i64: 8, 32>}, {pipeline_mode = #tpu.pipeline_mode<synchronous>, transform_indices = @transform_1, window_bounds = array<i64: 32, 64>}, {pipeline_mode = #tpu.pipeline_mode<synchronous>, transform_indices = @transform_2, window_bounds = array<i64: 1, 64>}, {pipeline_mode = #tpu.pipeline_mode<synchronous>, transform_indices = @transform_3, window_bounds = array<i64: 64, 16>}, {pipeline_mode = #tpu.pipeline_mode<synchronous>, transform_indices = @transform_4, window_bounds = array<i64: 1, 16>}, {pipeline_mode = #tpu.pipeline_mode<synchronous>, transform_indices = @transform_5, window_bounds = array<i64: 16, 128>}, {pipeline_mode = #tpu.pipeline_mode<synchronous>, transform_indices = @transform_6, window_bounds = array<i64: 1, 128>}, {pipeline_mode = #tpu.pipeline_mode<synchronous>, transform_indices = @transform_7, window_bounds = array<i64: 128, 8>}, {transform_indices = @transform_8, window_bounds = array<i64: 8, 8>}]} {
    %c0 = arith.constant 0 : index
    %c0_0 = arith.constant 0 : index
    %0 = vector.load %arg1[%c0, %c0_0] : memref<8x32xbf16, #tpu.memory_space<vmem>>, vector<8x32xbf16>
    %c0_1 = arith.constant 0 : index
    %c0_2 = arith.constant 0 : index
    %1 = vector.load %arg2[%c0_1, %c0_2] : memref<32x64xbf16, #tpu.memory_space<vmem>>, vector<32x64xbf16>
    %cst = arith.constant dense<0.000000e+00> : vector<8x64xf32>
    %2 = tpu.matmul %0, %1, %cst {dimension_numbers = #tpu.dot_dimension_numbers<[1], [0], [0], [1], [0, 0, 1, 1], [], []>} : vector<8x32xbf16>, vector<32x64xbf16>, vector<8x64xf32> -> vector<8x64xf32>
    %c0_3 = arith.constant 0 : index
    %c0_4 = arith.constant 0 : index
    %3 = vector.load %arg3[%c0_3, %c0_4] : memref<1x64xf32, #tpu.memory_space<vmem>>, vector<1x64xf32>
    %4 = vector.broadcast %3 : vector<1x64xf32> to vector<8x64xf32>
    %5 = arith.addf %2, %4 : vector<8x64xf32>
    %cst_5 = arith.constant dense<0.000000e+00> : vector<8xf32>
    %6 = vector.multi_reduction <add>, %5, %cst_5 [1] : vector<8x64xf32> to vector<8xf32>
    %7 = vector.shape_cast %6 : vector<8xf32> to vector<8x1xf32>
    %cst_6 = arith.constant 6.400000e+01 : f32
    %8 = vector.broadcast %cst_6 : f32 to vector<8x1xf32>
    %9 = arith.divf %7, %8 : vector<8x1xf32>
    %10 = vector.broadcast %9 : vector<8x1xf32> to vector<8x64xf32>
    %11 = arith.subf %5, %10 : vector<8x64xf32>
    %12 = vector.broadcast %9 : vector<8x1xf32> to vector<8x64xf32>
    %13 = arith.subf %5, %12 : vector<8x64xf32>
    %14 = arith.mulf %11, %13 : vector<8x64xf32>
    %cst_7 = arith.constant dense<0.000000e+00> : vector<8xf32>
    %15 = vector.multi_reduction <add>, %14, %cst_7 [1] : vector<8x64xf32> to vector<8xf32>
    %16 = vector.shape_cast %15 : vector<8xf32> to vector<8x1xf32>
    %cst_8 = arith.constant 6.400000e+01 : f32
    %17 = vector.broadcast %cst_8 : f32 to vector<8x1xf32>
    %18 = arith.divf %16, %17 : vector<8x1xf32>
    %19 = vector.broadcast %9 : vector<8x1xf32> to vector<8x64xf32>
    %20 = arith.subf %5, %19 : vector<8x64xf32>
    %cst_9 = arith.constant 9.99999974E-6 : f32
    %21 = vector.broadcast %cst_9 : f32 to vector<8x1xf32>
    %22 = arith.addf %18, %21 : vector<8x1xf32>
    %23 = math.rsqrt %22 : vector<8x1xf32>
    %24 = vector.broadcast %23 : vector<8x1xf32> to vector<8x64xf32>
    %25 = arith.mulf %20, %24 : vector<8x64xf32>
    %cst_10 = arith.constant 0.000000e+00 : f32
    %26 = vector.broadcast %cst_10 : f32 to vector<8x64xf32>
    %27 = arith.subf %26, %25 : vector<8x64xf32>
    %28 = math.exp %27 : vector<8x64xf32>
    %cst_11 = arith.constant 1.000000e+00 : f32
    %29 = vector.broadcast %cst_11 : f32 to vector<8x64xf32>
    %30 = arith.addf %29, %28 : vector<8x64xf32>
    %31 = tpu.reciprocal %30 {approx = true} : vector<8x64xf32> -> vector<8x64xf32>
    %32 = arith.mulf %25, %31 : vector<8x64xf32>
    %33 = arith.truncf %32 : vector<8x64xf32> to vector<8x64xbf16>
    %c0_12 = arith.constant 0 : index
    %c0_13 = arith.constant 0 : index
    %34 = vector.load %arg4[%c0_12, %c0_13] : memref<64x16xbf16, #tpu.memory_space<vmem>>, vector<64x16xbf16>
    %cst_14 = arith.constant dense<0.000000e+00> : vector<8x16xf32>
    %35 = tpu.matmul %33, %34, %cst_14 {dimension_numbers = #tpu.dot_dimension_numbers<[1], [0], [0], [1], [0, 0, 1, 1], [], []>} : vector<8x64xbf16>, vector<64x16xbf16>, vector<8x16xf32> -> vector<8x16xf32>
    %c0_15 = arith.constant 0 : index
    %c0_16 = arith.constant 0 : index
    %36 = vector.load %arg5[%c0_15, %c0_16] : memref<1x16xf32, #tpu.memory_space<vmem>>, vector<1x16xf32>
    %37 = vector.broadcast %36 : vector<1x16xf32> to vector<8x16xf32>
    %38 = arith.addf %35, %37 : vector<8x16xf32>
    %cst_17 = arith.constant dense<0.000000e+00> : vector<8xf32>
    %39 = vector.multi_reduction <add>, %38, %cst_17 [1] : vector<8x16xf32> to vector<8xf32>
    %40 = vector.shape_cast %39 : vector<8xf32> to vector<8x1xf32>
    %cst_18 = arith.constant 1.600000e+01 : f32
    %41 = vector.broadcast %cst_18 : f32 to vector<8x1xf32>
    %42 = arith.divf %40, %41 : vector<8x1xf32>
    %43 = vector.broadcast %42 : vector<8x1xf32> to vector<8x16xf32>
    %44 = arith.subf %38, %43 : vector<8x16xf32>
    %45 = vector.broadcast %42 : vector<8x1xf32> to vector<8x16xf32>
    %46 = arith.subf %38, %45 : vector<8x16xf32>
    %47 = arith.mulf %44, %46 : vector<8x16xf32>
    %cst_19 = arith.constant dense<0.000000e+00> : vector<8xf32>
    %48 = vector.multi_reduction <add>, %47, %cst_19 [1] : vector<8x16xf32> to vector<8xf32>
    %49 = vector.shape_cast %48 : vector<8xf32> to vector<8x1xf32>
    %cst_20 = arith.constant 1.600000e+01 : f32
    %50 = vector.broadcast %cst_20 : f32 to vector<8x1xf32>
    %51 = arith.divf %49, %50 : vector<8x1xf32>
    %52 = vector.broadcast %42 : vector<8x1xf32> to vector<8x16xf32>
    %53 = arith.subf %38, %52 : vector<8x16xf32>
    %cst_21 = arith.constant 9.99999974E-6 : f32
    %54 = vector.broadcast %cst_21 : f32 to vector<8x1xf32>
    %55 = arith.addf %51, %54 : vector<8x1xf32>
    %56 = math.rsqrt %55 : vector<8x1xf32>
    %57 = vector.broadcast %56 : vector<8x1xf32> to vector<8x16xf32>
    %58 = arith.mulf %53, %57 : vector<8x16xf32>
    %59 = arith.truncf %58 : vector<8x16xf32> to vector<8x16xbf16>
    %c0_22 = arith.constant 0 : index
    %c0_23 = arith.constant 0 : index
    %60 = vector.load %arg6[%c0_22, %c0_23] : memref<16x128xbf16, #tpu.memory_space<vmem>>, vector<16x128xbf16>
    %cst_24 = arith.constant dense<0.000000e+00> : vector<8x128xf32>
    %61 = tpu.matmul %59, %60, %cst_24 {dimension_numbers = #tpu.dot_dimension_numbers<[1], [0], [0], [1], [0, 0, 1, 1], [], []>} : vector<8x16xbf16>, vector<16x128xbf16>, vector<8x128xf32> -> vector<8x128xf32>
    %62 = arith.mulf %58, %58 : vector<8x16xf32>
    %cst_25 = arith.constant dense<0.000000e+00> : vector<8xf32>
    %63 = vector.multi_reduction <add>, %62, %cst_25 [1] : vector<8x16xf32> to vector<8xf32>
    %64 = vector.shape_cast %63 : vector<8xf32> to vector<8x1xf32>
    %c0_26 = arith.constant 0 : index
    %c0_27 = arith.constant 0 : index
    %65 = vector.load %arg7[%c0_26, %c0_27] : memref<1x128xf32, #tpu.memory_space<vmem>>, vector<1x128xf32>
    %66 = vector.broadcast %64 : vector<8x1xf32> to vector<8x128xf32>
    %67 = vector.broadcast %65 : vector<1x128xf32> to vector<8x128xf32>
    %68 = arith.addf %66, %67 : vector<8x128xf32>
    %cst_28 = arith.constant 2.000000e+00 : f32
    %69 = vector.broadcast %cst_28 : f32 to vector<8x128xf32>
    %70 = arith.mulf %69, %61 : vector<8x128xf32>
    %71 = arith.subf %68, %70 : vector<8x128xf32>
    %cst_29 = arith.constant 0.000000e+00 : f32
    %72 = vector.broadcast %cst_29 : f32 to vector<8x128xf32>
    %73 = arith.maximumf %71, %72 : vector<8x128xf32>
    %cst_30 = arith.constant -5.000000e-01 : f32
    %74 = vector.broadcast %cst_30 : f32 to vector<8x128xf32>
    %75 = arith.mulf %74, %73 : vector<8x128xf32>
    %76 = math.exp %75 : vector<8x128xf32>
    %77 = arith.truncf %76 : vector<8x128xf32> to vector<8x128xbf16>
    %c0_31 = arith.constant 0 : index
    %c0_32 = arith.constant 0 : index
    %78 = vector.load %arg8[%c0_31, %c0_32] : memref<128x8xbf16, #tpu.memory_space<vmem>>, vector<128x8xbf16>
    %cst_33 = arith.constant dense<0.000000e+00> : vector<8x8xf32>
    %79 = tpu.matmul %77, %78, %cst_33 {dimension_numbers = #tpu.dot_dimension_numbers<[1], [0], [0], [1], [0, 0, 1, 1], [], []>} : vector<8x128xbf16>, vector<128x8xbf16>, vector<8x8xf32> -> vector<8x8xf32>
    %80 = tpu.iota {dimensions = array<i32: 1>} : vector<8x8xi32>
    %81 = math.tanh %79 : vector<8x8xf32>
    %cst_34 = arith.constant 3.000000e+00 : f32
    %82 = vector.broadcast %cst_34 : f32 to vector<8x8xf32>
    %83 = arith.mulf %82, %81 : vector<8x8xf32>
    %cst_35 = arith.constant -2.000000e+01 : f32
    %cst_36 = arith.constant 2.000000e+00 : f32
    %84 = vector.broadcast %cst_35 : f32 to vector<8x8xf32>
    %85 = arith.maximumf %84, %79 : vector<8x8xf32>
    %86 = vector.broadcast %cst_36 : f32 to vector<8x8xf32>
    %87 = arith.minimumf %86, %85 : vector<8x8xf32>
    %88 = math.exp %87 : vector<8x8xf32>
    %c4_i32 = arith.constant 4 : i32
    %89 = vector.broadcast %c4_i32 : i32 to vector<8x8xi32>
    %90 = arith.cmpi slt, %80, %89 : vector<8x8xi32>
    %91 = arith.select %90, %83, %88 : vector<8x8xi1>, vector<8x8xf32>
    %c0_37 = arith.constant 0 : index
    %c0_38 = arith.constant 0 : index
    %92 = vector.load %arg9[%c0_37, %c0_38] : memref<8x8xf32, #tpu.memory_space<vmem>>, vector<8x8xf32>
    tpu.vector_store %arg9[%c0_37, %c0_38], %91 {strides = array<i32>} : memref<8x8xf32, #tpu.memory_space<vmem>>, vector<8x8xf32>,
    return
  }
  func.func @transform_0(%arg0: i32) -> (i32, i32) {
    %c0_i32 = arith.constant 0 : i32
    %c0_i32_0 = arith.constant 0 : i32
    return %arg0, %c0_i32 : i32, i32
  }
  func.func @transform_1(%arg0: i32) -> (i32, i32) {
    %c0_i32 = arith.constant 0 : i32
    %c0_i32_0 = arith.constant 0 : i32
    %c0_i32_1 = arith.constant 0 : i32
    return %c0_i32, %c0_i32_0 : i32, i32
  }
  func.func @transform_2(%arg0: i32) -> (i32, i32) {
    %c0_i32 = arith.constant 0 : i32
    %c0_i32_0 = arith.constant 0 : i32
    %c0_i32_1 = arith.constant 0 : i32
    return %c0_i32, %c0_i32_0 : i32, i32
  }
  func.func @transform_3(%arg0: i32) -> (i32, i32) {
    %c0_i32 = arith.constant 0 : i32
    %c0_i32_0 = arith.constant 0 : i32
    %c0_i32_1 = arith.constant 0 : i32
    return %c0_i32, %c0_i32_0 : i32, i32
  }
  func.func @transform_4(%arg0: i32) -> (i32, i32) {
    %c0_i32 = arith.constant 0 : i32
    %c0_i32_0 = arith.constant 0 : i32
    %c0_i32_1 = arith.constant 0 : i32
    return %c0_i32, %c0_i32_0 : i32, i32
  }
  func.func @transform_5(%arg0: i32) -> (i32, i32) {
    %c0_i32 = arith.constant 0 : i32
    %c0_i32_0 = arith.constant 0 : i32
    %c0_i32_1 = arith.constant 0 : i32
    return %c0_i32, %c0_i32_0 : i32, i32
  }
  func.func @transform_6(%arg0: i32) -> (i32, i32) {
    %c0_i32 = arith.constant 0 : i32
    %c0_i32_0 = arith.constant 0 : i32
    %c0_i32_1 = arith.constant 0 : i32
    return %c0_i32, %c0_i32_0 : i32, i32
  }
  func.func @transform_7(%arg0: i32) -> (i32, i32) {
    %c0_i32 = arith.constant 0 : i32
    %c0_i32_0 = arith.constant 0 : i32
    %c0_i32_1 = arith.constant 0 : i32
    return %c0_i32, %c0_i32_0 : i32, i32
  }
  func.func @transform_8(%arg0: i32) -> (i32, i32) {
    %c0_i32 = arith.constant 0 : i32
    %c0_i32_0 = arith.constant 0 : i32
    return %arg0, %c0_i32 : i32, i32
  }
}

</mosaic_0001>

<llo_original>
// kernel: tpu_custom_call.1
$region0: #{tpu_custom_call.1}
  #allocation0 [shape = 'u32[]', space=smem, size = 0x4, offset = 0x4, fixed_abs, tag = 'smem constant byte address 0x4 - core index']
  #allocation1 [shape = 'u32[144,128]{1,0:T(1,128)}', space=vmem, size = 0x12000, scoped, tag = 'internal scratch']
  %s0 = inlined_call_operand.vmem [shape: bf16[8,32], index: 0, kind: input, shape index: {}]
  %s1 = inlined_call_operand.vmem [shape: bf16[32,64], index: 1, kind: input, shape index: {}]
  %s2 = inlined_call_operand.vmem [shape: f32[1,64], index: 2, kind: input, shape index: {}]
  %s3 = inlined_call_operand.vmem [shape: bf16[64,16], index: 3, kind: input, shape index: {}]
  %s4 = inlined_call_operand.vmem [shape: f32[1,16], index: 4, kind: input, shape index: {}]
  %s5 = inlined_call_operand.vmem [shape: bf16[16,128], index: 5, kind: input, shape index: {}]
  %s6 = inlined_call_operand.vmem [shape: f32[1,128], index: 6, kind: input, shape index: {}]
  %s7 = inlined_call_operand.vmem [shape: bf16[128,8], index: 7, kind: input, shape index: {}]
  %s8 = inlined_call_operand.hbm [shape: f32[8,8], index: 8, kind: output, shape index: {}]
  %s9 = sld [smem:[#allocation0]]
  $region42: #{tpu_custom_call.1} parent=0
    _
  %s11 = ssub.s32 1, %s9
  %s12 = scalar_select 0, %s11, %s9
  $region1: #{tpu_custom_call.1} parent=0
    #allocation2 [shape = 'u8[4096]{0}', space=vmem, size = 0x1000, scoped, tag = 'output window, operand 0, single buffered']
    #allocation3 [shape = 's32[1]{0}', space=sflag, size = 0x4, scoped, tag = 'scoped memory for tpu_custom_call.1']
    %13 = vsyncpa [#allocation3], 0
    // Predicated region
    $region2: #{tpu_custom_call.1} parent=1 // pred_check
      _
    $region3: #{tpu_custom_call.1} parent=1 // pred_check_branch
      %15 = sbr.rel (0) target = $region5
    $region4: #{tpu_custom_call.1} parent=1 // pred_region
      _
    $region5: #{tpu_custom_call.1} parent=1 // pred_fallthru
      _
    // Predicated region
    $region6: #{tpu_custom_call.1} parent=1 // pred_check
      _
    $region7: #{tpu_custom_call.1} parent=1 // pred_check_branch
      %17 = sbr.rel (0) target = $region9
    $region8: #{tpu_custom_call.1} parent=1 // pred_region
      _
    $region9: #{tpu_custom_call.1} parent=1 // pred_fallthru
      _
    // Predicated region
    $region10: #{tpu_custom_call.1} parent=1 // pred_check
      _
    $region11: #{tpu_custom_call.1} parent=1 // pred_check_branch
      %19 = sbr.rel (0) target = $region13
    $region12: #{tpu_custom_call.1} parent=1 // pred_region
      _
    $region13: #{tpu_custom_call.1} parent=1 // pred_fallthru
      _
    // Predicated region
    $region14: #{tpu_custom_call.1} parent=1 // pred_check
      _
    $region15: #{tpu_custom_call.1} parent=1 // pred_check_branch
      %21 = sbr.rel (0) target = $region17
    $region16: #{tpu_custom_call.1} parent=1 // pred_region
      _
    $region17: #{tpu_custom_call.1} parent=1 // pred_fallthru
      _
    // Predicated region
    $region18: #{tpu_custom_call.1} parent=1 // pred_check
      _
    $region19: #{tpu_custom_call.1} parent=1 // pred_check_branch
      %23 = sbr.rel (0) target = $region21
    $region20: #{tpu_custom_call.1} parent=1 // pred_region
      _
    $region21: #{tpu_custom_call.1} parent=1 // pred_fallthru
      _
    // Predicated region
    $region22: #{tpu_custom_call.1} parent=1 // pred_check
      _
    $region23: #{tpu_custom_call.1} parent=1 // pred_check_branch
      %25 = sbr.rel (0) target = $region25
    $region24: #{tpu_custom_call.1} parent=1 // pred_region
      _
    $region25: #{tpu_custom_call.1} parent=1 // pred_fallthru
      _
    // Predicated region
    $region26: #{tpu_custom_call.1} parent=1 // pred_check
      _
    $region27: #{tpu_custom_call.1} parent=1 // pred_check_branch
      %27 = sbr.rel (0) target = $region29
    $region28: #{tpu_custom_call.1} parent=1 // pred_region
      _
    $region29: #{tpu_custom_call.1} parent=1 // pred_fallthru
      _
    // Predicated region
    $region30: #{tpu_custom_call.1} parent=1 // pred_check
      _
    $region31: #{tpu_custom_call.1} parent=1 // pred_check_branch
      %29 = sbr.rel (0) target = $region33
    $region32: #{tpu_custom_call.1} parent=1 // pred_region
      _
    $region33: #{tpu_custom_call.1} parent=1 // pred_fallthru
      _
    %v31 = vld [vmem:[%s0] sm:$0xf]
    %v32 = vld [vmem:[%s1] sm:$0xf]
    %v33 = vld [vmem:[%s1 + $0x4] sm:$0xf]
    %v34 = vld [vmem:[%s1 + $0x8] sm:$0xf]
    %v35 = vld [vmem:[%s1 + $0xc] sm:$0xf]
    %v36 = vld [vmem:[%s2] sm:$0x1]
    %v38 = vlaneseq
    %v39 = vshrl.u32 %v38, 7
    %v40 = vsub.s32 0, %v39
    %v41 = vrot.slane %v36, %v40
    %v47 = vunpack.c.l.b16 %v32
    %v48 = vunpack.c.l.b16 %v33
    %v49 = vunpack.c.l.b16 %v34
    %v50 = vunpack.c.l.b16 %v35
    %v51 = vpack.c.b16 %v48, %v47
    %v52 = vpack.c.b16 %v50, %v49
    %vm55 = vcmask 261120
    %v57 = vsel %vm55, %v31, 0
    %59 = vmatprep.subr.bf16.mxu0 0
    %60 = vmatpush1.bf16.msra.mxu0 %v51
    %61 = vmatprep.subr.bf16.mxu0 0
    %62 = vmatpush1.bf16.msra.mxu0 %v52
    %63 = vmatprep.subr.bf16.mxu0 0
    %64 = vmatpush1.bf16.msra.mxu0 0
    %65 = vmatprep.subr.bf16.mxu0 0
    %66 = vmatpush1.bf16.msra.mxu0 0
    %67 = vmatprep.subr.bf16.mxu0 0
    %68 = vmatpush1.bf16.msra.mxu0 0
    %69 = vmatprep.subr.bf16.mxu0 0
    %70 = vmatpush1.bf16.msra.mxu0 0
    %71 = vmatprep.subr.bf16.mxu0 0
    %72 = vmatpush1.bf16.msra.mxu0 0
    %73 = vmatprep.subr.bf16.mxu0 0
    %74 = vmatpush1.bf16.msra.mxu0 0
    %75 = vmatprep.subr.bf16.mxu0 0
    %76 = vmatpush1.bf16.msra.mxu0 0
    %77 = vmatprep.subr.bf16.mxu0 0
    %78 = vmatpush1.bf16.msra.mxu0 0
    %79 = vmatprep.subr.bf16.mxu0 0
    %80 = vmatpush1.bf16.msra.mxu0 0
    %81 = vmatprep.subr.bf16.mxu0 0
    %82 = vmatpush1.bf16.msra.mxu0 0
    %83 = vmatprep.subr.bf16.mxu0 0
    %84 = vmatpush1.bf16.msra.mxu0 0
    %85 = vmatprep.subr.bf16.mxu0 0
    %86 = vmatpush1.bf16.msra.mxu0 0
    %87 = vmatprep.subr.bf16.mxu0 0
    %88 = vmatpush1.bf16.msra.mxu0 0
    %89 = vmatprep.subr.bf16.mxu0 0
    %90 = vmatpush1.bf16.msra.mxu0 0
    %91 = vmatprep.mubr.bf16.mxu0 0
    %92 = vmatmul.mubr.bf16.gmra.mrb[0].mxu0 %v57
    %v93 = vpop.f32.mrb[0].mxu0
    %v94 = vadd.f32 %v41, %v93
    %v95 = vpop.f32.mrb[0].mxu0
    %v96 = vpop.f32.mrb[0].mxu0
    %v97 = vpop.f32.mrb[0].mxu0
    %98 = vdwg.mxu0
    %vm99 = vcmask 523264
    %v100 = vsel %vm99, %v94, 0.0
    %101 = vadd.xlane.f32.xlu0 %v100
    %v102 = vpop.xlane.xlu0 %101
    %v103 = vrcp.pop 64.0
    %v104 = vmul.f32 %v102, %v103
    %v105 = vsub.f32 %v94, %v104
    %v106 = vmul.f32 %v105, %v105
    %v107 = vsel %vm99, %v106, 0.0
    %108 = vadd.xlane.f32.xlu0 %v107
    %v109 = vpop.xlane.xlu0 %108
    %v110 = vmul.f32 %v109, %v103
    %v111 = vadd.f32 %v110, 1e-05
    %v112 = vrsqrt.pop %v111
    %v113 = vmul.f32 %v105, %v112
    %v114 = vsub.f32 0.0, %v113
    %v115 = vmul.f32 %v114, 1.442695
    %v116 = vpow.pop %v115
    %v117 = vadd.f32 %v116, 1.0
    %v118 = vrcp.pop %v117
    %v119 = vmul.f32 %v113, %v118
    %v120 = vpack.c.bf16 %v119, %v119
    %v121 = vld [vmem:[%s3] sm:$0xf]
    %v122 = vld [vmem:[%s3 + $0x4] sm:$0xf]
    %v123 = vld [vmem:[%s3 + $0x8] sm:$0xf]
    %v124 = vld [vmem:[%s3 + $0xc] sm:$0xf]
    %v125 = vld [vmem:[%s3 + $0x10] sm:$0xf]
    %v126 = vld [vmem:[%s3 + $0x14] sm:$0xf]
    %v127 = vld [vmem:[%s3 + $0x18] sm:$0xf]
    %v128 = vld [vmem:[%s3 + $0x1c] sm:$0xf]
    %v129 = vld [vmem:[%s4] sm:$0x1]
    %v131 = vlaneseq
    %v132 = vshrl.u32 %v131, 7
    %v133 = vsub.s32 0, %v132
    %v134 = vrot.slane %v129, %v133
    %v144 = vunpack.c.l.b16 %v121
    %v145 = vunpack.c.l.b16 %v122
    %v146 = vunpack.c.l.b16 %v123
    %v147 = vunpack.c.l.b16 %v124
    %v148 = vunpack.c.l.b16 %v125
    %v149 = vunpack.c.l.b16 %v126
    %v150 = vunpack.c.l.b16 %v127
    %v151 = vunpack.c.l.b16 %v128
    %v152 = vpack.c.b16 %v145, %v144
    %v153 = vpack.c.b16 %v147, %v146
    %v154 = vpack.c.b16 %v149, %v148
    %v155 = vpack.c.b16 %v151, %v150
    %v161 = vsel %vm99, %v120, 0
    %163 = vmatprep.subr.bf16.mxu0 0
    %164 = vmatpush1.bf16.msra.mxu0 %v152
    %165 = vmatprep.subr.bf16.mxu0 0
    %166 = vmatpush1.bf16.msra.mxu0 %v153
    %167 = vmatprep.subr.bf16.mxu0 0
    %168 = vmatpush1.bf16.msra.mxu0 %v154
    %169 = vmatprep.subr.bf16.mxu0 0
    %170 = vmatpush1.bf16.msra.mxu0 %v155
    %171 = vmatprep.subr.bf16.mxu0 0
    %172 = vmatpush1.bf16.msra.mxu0 0
    %173 = vmatprep.subr.bf16.mxu0 0
    %174 = vmatpush1.bf16.msra.mxu0 0
    %175 = vmatprep.subr.bf16.mxu0 0
    %176 = vmatpush1.bf16.msra.mxu0 0
    %177 = vmatprep.subr.bf16.mxu0 0
    %178 = vmatpush1.bf16.msra.mxu0 0
    %179 = vmatprep.subr.bf16.mxu0 0
    %180 = vmatpush1.bf16.msra.mxu0 0
    %181 = vmatprep.subr.bf16.mxu0 0
    %182 = vmatpush1.bf16.msra.mxu0 0
    %183 = vmatprep.subr.bf16.mxu0 0
    %184 = vmatpush1.bf16.msra.mxu0 0
    %185 = vmatprep.subr.bf16.mxu0 0
    %186 = vmatpush1.bf16.msra.mxu0 0
    %187 = vmatprep.subr.bf16.mxu0 0
    %188 = vmatpush1.bf16.msra.mxu0 0
    %189 = vmatprep.subr.bf16.mxu0 0
    %190 = vmatpush1.bf16.msra.mxu0 0
    %191 = vmatprep.subr.bf16.mxu0 0
    %192 = vmatpush1.bf16.msra.mxu0 0
    %193 = vmatprep.subr.bf16.mxu0 0
    %194 = vmatpush1.bf16.msra.mxu0 0
    %195 = vmatprep.mubr.bf16.mxu0 0
    %196 = vmatmul.mubr.bf16.gmra.mrb[0].mxu0 %v161
    %v197 = vpop.f32.mrb[0].mxu0
    %v198 = vadd.f32 %v134, %v197
    %v199 = vpop.f32.mrb[0].mxu0
    %v200 = vpop.f32.mrb[0].mxu0
    %v201 = vpop.f32.mrb[0].mxu0
    %202 = vdwg.mxu0
    %vm203 = vcmask 130048
    %v204 = vsel %vm203, %v198, 0.0
    %205 = vadd.xlane.f32.xlu0 %v204
    %v206 = vpop.xlane.xlu0 %205
    %v207 = vrcp.pop 16.0
    %v208 = vmul.f32 %v206, %v207
    %v209 = vsub.f32 %v198, %v208
    %v210 = vmul.f32 %v209, %v209
    %v211 = vsel %vm203, %v210, 0.0
    %212 = vadd.xlane.f32.xlu0 %v211
    %v213 = vpop.xlane.xlu0 %212
    %v214 = vmul.f32 %v213, %v207
    %v215 = vadd.f32 %v214, 1e-05
    %v216 = vrsqrt.pop %v215
    %v217 = vmul.f32 %v209, %v216
    %v218 = vpack.c.bf16 %v217, %v217
    %v219 = vld [vmem:[%s5] sm:$0xf]
    %v220 = vld [vmem:[%s5 + $0x4] sm:$0xf]
    %v223 = vunpack.c.l.b16 %v219
    %v224 = vunpack.c.l.b16 %v220
    %v225 = vpack.c.b16 %v224, %v223
    %v228 = vsel %vm203, %v218, 0
    %230 = vmatprep.subr.bf16.mxu0 0
    %231 = vmatpush1.bf16.msra.mxu0 %v225
    %232 = vmatprep.subr.bf16.mxu0 0
    %233 = vmatpush1.bf16.msra.mxu0 0
    %234 = vmatprep.subr.bf16.mxu0 0
    %235 = vmatpush1.bf16.msra.mxu0 0
    %236 = vmatprep.subr.bf16.mxu0 0
    %237 = vmatpush1.bf16.msra.mxu0 0
    %238 = vmatprep.subr.bf16.mxu0 0
    %239 = vmatpush1.bf16.msra.mxu0 0
    %240 = vmatprep.subr.bf16.mxu0 0
    %241 = vmatpush1.bf16.msra.mxu0 0
    %242 = vmatprep.subr.bf16.mxu0 0
    %243 = vmatpush1.bf16.msra.mxu0 0
    %244 = vmatprep.subr.bf16.mxu0 0
    %245 = vmatpush1.bf16.msra.mxu0 0
    %246 = vmatprep.subr.bf16.mxu0 0
    %247 = vmatpush1.bf16.msra.mxu0 0
    %248 = vmatprep.subr.bf16.mxu0 0
    %249 = vmatpush1.bf16.msra.mxu0 0
    %250 = vmatprep.subr.bf16.mxu0 0
    %251 = vmatpush1.bf16.msra.mxu0 0
    %252 = vmatprep.subr.bf16.mxu0 0
    %253 = vmatpush1.bf16.msra.mxu0 0
    %254 = vmatprep.subr.bf16.mxu0 0
    %255 = vmatpush1.bf16.msra.mxu0 0
    %256 = vmatprep.subr.bf16.mxu0 0
    %257 = vmatpush1.bf16.msra.mxu0 0
    %258 = vmatprep.subr.bf16.mxu0 0
    %259 = vmatpush1.bf16.msra.mxu0 0
    %260 = vmatprep.subr.bf16.mxu0 0
    %261 = vmatpush1.bf16.msra.mxu0 0
    %262 = vmatprep.mubr.bf16.mxu0 0
    %263 = vmatmul.mubr.bf16.gmra.mrb[0].mxu0 %v228
    %v264 = vpop.f32.mrb[0].mxu0
    %v265 = vadd.f32 0.0, %v264
    %v266 = vpop.f32.mrb[0].mxu0
    %v267 = vpop.f32.mrb[0].mxu0
    %v268 = vpop.f32.mrb[0].mxu0
    %269 = vdwg.mxu0
    %v270 = vmul.f32 %v217, %v217
    %v271 = vsel %vm203, %v270, 0.0
    %272 = vadd.xlane.f32.xlu0 %v271
    %v273 = vpop.xlane.xlu0 %272
    %v274 = vld [vmem:[%s6] sm:$0x1]
    %v276 = vlaneseq
    %v277 = vshrl.u32 %v276, 7
    %v278 = vsub.s32 0, %v277
    %v279 = vrot.slane %v274, %v278
    %v281 = vadd.f32 %v273, %v279
    %v282 = vmul.f32 %v265, 2.0
    %v283 = vsub.f32 %v281, %v282
    %v284 = vmax.f32 %v283, 0.0
    %v285 = vmul.f32 %v284, -0.5
    %v286 = vmul.f32 %v285, 1.442695
    %v287 = vpow.pop %v286
    %v288 = vpack.c.bf16 %v287, %v287
    %v289 = vld [vmem:[%s7] sm:$0xf]
    %v290 = vld [vmem:[%s7 + $0x4] sm:$0xf]
    %v291 = vld [vmem:[%s7 + $0x8] sm:$0xf]
    %v292 = vld [vmem:[%s7 + $0xc] sm:$0xf]
    %v293 = vld [vmem:[%s7 + $0x10] sm:$0xf]
    %v294 = vld [vmem:[%s7 + $0x14] sm:$0xf]
    %v295 = vld [vmem:[%s7 + $0x18] sm:$0xf]
    %v296 = vld [vmem:[%s7 + $0x1c] sm:$0xf]
    %v297 = vld [vmem:[%s7 + $0x20] sm:$0xf]
    %v298 = vld [vmem:[%s7 + $0x24] sm:$0xf]
    %v299 = vld [vmem:[%s7 + $0x28] sm:$0xf]
    %v300 = vld [vmem:[%s7 + $0x2c] sm:$0xf]
    %v301 = vld [vmem:[%s7 + $0x30] sm:$0xf]
    %v302 = vld [vmem:[%s7 + $0x34] sm:$0xf]
    %v303 = vld [vmem:[%s7 + $0x38] sm:$0xf]
    %v304 = vld [vmem:[%s7 + $0x3c] sm:$0xf]
    %v321 = vunpack.c.l.b16 %v289
    %v322 = vunpack.c.l.b16 %v290
    %v323 = vunpack.c.l.b16 %v291
    %v324 = vunpack.c.l.b16 %v292
    %v325 = vunpack.c.l.b16 %v293
    %v326 = vunpack.c.l.b16 %v294
    %v327 = vunpack.c.l.b16 %v295
    %v328 = vunpack.c.l.b16 %v296
    %v329 = vunpack.c.l.b16 %v297
    %v330 = vunpack.c.l.b16 %v298
    %v331 = vunpack.c.l.b16 %v299
    %v332 = vunpack.c.l.b16 %v300
    %v333 = vunpack.c.l.b16 %v301
    %v334 = vunpack.c.l.b16 %v302
    %v335 = vunpack.c.l.b16 %v303
    %v336 = vunpack.c.l.b16 %v304
    %v337 = vpack.c.b16 %v322, %v321
    %v338 = vpack.c.b16 %v324, %v323
    %v339 = vpack.c.b16 %v326, %v325
    %v340 = vpack.c.b16 %v328, %v327
    %v341 = vpack.c.b16 %v330, %v329
    %v342 = vpack.c.b16 %v332, %v331
    %v343 = vpack.c.b16 %v334, %v333
    %v344 = vpack.c.b16 %v336, %v335
    %353 = vmatprep.subr.bf16.mxu0 0
    %354 = vmatpush1.bf16.msra.mxu0 %v337
    %355 = vmatprep.subr.bf16.mxu0 0
    %356 = vmatpush1.bf16.msra.mxu0 %v338
    %357 = vmatprep.subr.bf16.mxu0 0
    %358 = vmatpush1.bf16.msra.mxu0 %v339
    %359 = vmatprep.subr.bf16.mxu0 0
    %360 = vmatpush1.bf16.msra.mxu0 %v340
    %361 = vmatprep.subr.bf16.mxu0 0
    %362 = vmatpush1.bf16.msra.mxu0 %v341
    %363 = vmatprep.subr.bf16.mxu0 0
    %364 = vmatpush1.bf16.msra.mxu0 %v342
    %365 = vmatprep.subr.bf16.mxu0 0
    %366 = vmatpush1.bf16.msra.mxu0 %v343
    %367 = vmatprep.subr.bf16.mxu0 0
    %368 = vmatpush1.bf16.msra.mxu0 %v344
    %369 = vmatprep.subr.bf16.mxu0 0
    %370 = vmatpush1.bf16.msra.mxu0 0
    %371 = vmatprep.subr.bf16.mxu0 0
    %372 = vmatpush1.bf16.msra.mxu0 0
    %373 = vmatprep.subr.bf16.mxu0 0
    %374 = vmatpush1.bf16.msra.mxu0 0
    %375 = vmatprep.subr.bf16.mxu0 0
    %376 = vmatpush1.bf16.msra.mxu0 0
    %377 = vmatprep.subr.bf16.mxu0 0
    %378 = vmatpush1.bf16.msra.mxu0 0
    %379 = vmatprep.subr.bf16.mxu0 0
    %380 = vmatpush1.bf16.msra.mxu0 0
    %381 = vmatprep.subr.bf16.mxu0 0
    %382 = vmatpush1.bf16.msra.mxu0 0
    %383 = vmatprep.subr.bf16.mxu0 0
    %384 = vmatpush1.bf16.msra.mxu0 0
    %385 = vmatprep.mubr.bf16.mxu0 0
    %386 = vmatmul.mubr.bf16.gmra.mrb[0].mxu0 %v288
    %v387 = vpop.f32.mrb[0].mxu0
    %v388 = vadd.f32 0.0, %v387
    %v389 = vpop.f32.mrb[0].mxu0
    %v390 = vpop.f32.mrb[0].mxu0
    %v391 = vpop.f32.mrb[0].mxu0
    %392 = vdwg.mxu0
    %v393 = vlaneseq
    %v394 = vand.u32 %v393, 127
    %v395 = vtanh.pop %v388
    %v396 = vmul.f32 %v395, 3.0
    %v397 = vmax.f32 %v388, -20.0
    %v398 = vmin.f32 %v397, 2.0
    %v399 = vmul.f32 %v398, 1.442695
    %v400 = vpow.pop %v399
    %vm401 = vcmp.lt.s32.totalorder %v394, 4
    %v402 = vsel %vm401, %v396, %v400
    %vm403 = vcmask 64512
    %404 = vst.msk [vmem:[#allocation2] sm:$0xff] %vm403, %v402
    // Predicated region
    $region34: #{tpu_custom_call.1} parent=1 // pred_check
      _
    $region35: #{tpu_custom_call.1} parent=1 // pred_check_branch
      %406 = sbr.rel (0) target = $region37
    $region36: #{tpu_custom_call.1} parent=1 // pred_region
      %s408 = ssub.s32 128, 128
      %409 = vsyncadd [#allocation3], %s408
      %s411 = sshll.u32 [#allocation2], 4
      %s412 = int_to_ptr.vmem [resolvable:$true] %s411
      %414 = dma.vmem_to_hbm [thread:$0]  %s412, 128, %s8, [#allocation3]
    $region37: #{tpu_custom_call.1} parent=1 // pred_fallthru
      _
    // Predicated region
    $region38: #{tpu_custom_call.1} parent=1 // pred_check
      _
    $region39: #{tpu_custom_call.1} parent=1 // pred_check_branch
      %416 = sbr.rel (0) target = $region41
    $region40: #{tpu_custom_call.1} parent=1 // pred_region
      %417 = dma.done [#allocation3], 128
    $region41: #{tpu_custom_call.1} parent=1 // pred_fallthru
      _
    %418 = vsyncpa [#allocation3], 1

</llo_original>
